<compile_context>
chip_gen: v7x
topology: tpu7x:2x2x1
jax: 0.10.0
libtpu: 0.0.40
codegen_flags: <defaults>
</compile_context>

<pallas_src>
import functools

import numpy as np
import jax
import jax.numpy as jnp
from jax.experimental import pallas as pl
from jax.experimental.pallas import tpu as pltpu


def _adaptive_pool_kernel(x_ref, m_ref, s_ref, o_ref):
    # x_ref: (Rb, DHW) row block (rows are (n, c) pairs, lanes are flat D*H*W)
    # m_ref: (DHW, 4)  0/1 quadrant-selection matrix (constant across grid)
    # s_ref: (1, 4)    per-quadrant 1/count scales (f32)
    # o_ref: (Rb, 4)   pooled output rows
    acc = jnp.dot(x_ref[...], m_ref[...], preferred_element_type=jnp.float32)
    o_ref[...] = (acc * s_ref[...]).astype(o_ref.dtype)


def _adaptive_bins(size, out_size):
    """PyTorch adaptive-pool bin boundaries [(start, end), ...]."""
    return [((j * size) // out_size, -(-((j + 1) * size) // out_size))
            for j in range(out_size)]


def _pick_block_rows(total_rows, row_bytes, max_tile_bytes=4 << 20):
    """Largest power-of-2 row block that divides total_rows, fits the tile
    budget, and still leaves a few grid steps for pipelining / megacore."""
    best = 8
    r = 8
    while r <= total_rows:
        if total_rows % r == 0 and r * row_bytes <= max_tile_bytes:
            best = r
        r *= 2
    while best > 8 and total_rows // best < 4:
        best //= 2
    return best


def adaptive_pool_bruno(x_ncdhw):
    """AdaptiveAvgPool3d((1, 2, 2)) + view(-1, 2048). Input: (N, 512, D, H, W)."""
    N, C, D, H, W = x_ncdhw.shape
    assert C * 4 == 2048, "view(-1, 2048) requires C == 512"
    dtype = x_ncdhw.dtype
    DHW = D * H * W
    total_rows = N * C

    # Free, contiguous reshape — no transpose, no extra HBM traffic.
    x2 = x_ncdhw.reshape(total_rows, DHW)

    # Build the 0/1 selection matrix and per-quadrant scales (trace-time consts).
    m_np = np.zeros((DHW, 4), dtype=np.float32)
    s_np = np.zeros((1, 4), dtype=np.float32)
    for qh, (h0, h1) in enumerate(_adaptive_bins(H, 2)):
        for qw, (w0, w1) in enumerate(_adaptive_bins(W, 2)):
            q = qh * 2 + qw
            s_np[0, q] = 1.0 / float(D * (h1 - h0) * (w1 - w0))
            for d in range(D):
                for h in range(h0, h1):
                    for w in range(w0, w1):
                        m_np[d * H * W + h * W + w, q] = 1.0
    m = jnp.asarray(m_np, dtype=dtype)   # 0/1 is exact in bf16/fp8 too
    s = jnp.asarray(s_np)                # f32 scales

    itemsize = np.dtype(dtype).itemsize
    rb = _pick_block_rows(total_rows, DHW * itemsize)
    grid = (total_rows // rb,)

    out = pl.pallas_call(
        _adaptive_pool_kernel,
        out_shape=jax.ShapeDtypeStruct((total_rows, 4), dtype),
        grid=grid,
        in_specs=[
            pl.BlockSpec((rb, DHW), lambda i: (i, 0)),   # streamed row block
            pl.BlockSpec((DHW, 4), lambda i: (0, 0)),    # resident constant
            pl.BlockSpec((1, 4), lambda i: (0, 0)),      # resident constant
        ],
        out_specs=pl.BlockSpec((rb, 4), lambda i: (i, 0)),
        compiler_params=pltpu.CompilerParams(
            dimension_semantics=("parallel",),
        ),
        cost_estimate=pl.CostEstimate(
            flops=2 * total_rows * DHW * 4,
            transcendentals=0,
            bytes_accessed=int(total_rows) * DHW * itemsize
            + DHW * 4 * itemsize
            + int(total_rows) * 4 * itemsize,
        ),
    )(x2, m, s)

    # (N*C, 4) -> (N, C*4): exactly PyTorch's C-major flatten (c*4 + h*2 + w).
    return out.reshape(N, C * 4)


def _reference(x):
    """Pure-JAX AdaptiveAvgPool3d((1,2,2)) + view(-1, 2048)."""
    N, C, D, H, W = x.shape
    cols = []
    for h0, h1 in _adaptive_bins(H, 2):
        for w0, w1 in _adaptive_bins(W, 2):
            cols.append(jnp.mean(x[:, :, :, h0:h1, w0:w1], axis=(2, 3, 4)))
    p = jnp.stack(cols, axis=-1)  # (N, C, 4)
    return p.reshape(N, C * 4)


if __name__ == "__main__":
    key = jax.random.PRNGKey(0)
    # C must be 512 for view(-1, 2048); small D/H/W for the test.
    N, C, D, H, W = 2, 512, 2, 4, 4
    x = jax.random.normal(key, (N, C, D, H, W), dtype=jnp.float32)

    out = jax.block_until_ready(adaptive_pool_bruno(x))

    ref = _reference(x)
    assert out.shape == (N, 2048), out.shape
    assert jnp.allclose(out, ref, atol=1e-5, rtol=1e-5), "mismatch vs reference"

    print("KERNEL_OK")
</pallas_src>

<mosaic_0001>
module attributes {stable_mosaic.version = 11 : i64} {
  func.func @_adaptive_pool_kernel(%arg0: i32, %arg1: memref<256x32xf32, #tpu.memory_space<vmem>>, %arg2: memref<32x4xf32, #tpu.memory_space<vmem>>, %arg3: memref<1x4xf32, #tpu.memory_space<vmem>>, %arg4: memref<256x4xf32, #tpu.memory_space<vmem>>) attributes {dimension_semantics = [#tpu.dimension_semantics<parallel>], iteration_bounds = array<i64: 4>, scalar_prefetch = 0 : i64, scratch_operands = 0 : i64, tpu.core_type = #tpu.core_type<tc>, window_params = [{transform_indices = @transform_0, window_bounds = array<i64: 256, 32>}, {pipeline_mode = #tpu.pipeline_mode<synchronous>, transform_indices = @transform_1, window_bounds = array<i64: 32, 4>}, {pipeline_mode = #tpu.pipeline_mode<synchronous>, transform_indices = @transform_2, window_bounds = array<i64: 1, 4>}, {transform_indices = @transform_3, window_bounds = array<i64: 256, 4>}]} {
    %c0 = arith.constant 0 : index
    %c0_0 = arith.constant 0 : index
    %0 = vector.load %arg1[%c0, %c0_0] : memref<256x32xf32, #tpu.memory_space<vmem>>, vector<256x32xf32>
    %c0_1 = arith.constant 0 : index
    %c0_2 = arith.constant 0 : index
    %1 = vector.load %arg2[%c0_1, %c0_2] : memref<32x4xf32, #tpu.memory_space<vmem>>, vector<32x4xf32>
    %cst = arith.constant dense<0.000000e+00> : vector<256x4xf32>
    %2 = tpu.matmul %0, %1, %cst {dimension_numbers = #tpu.dot_dimension_numbers<[1], [0], [0], [1], [0, 0, 1, 1], [], []>} : vector<256x32xf32>, vector<32x4xf32>, vector<256x4xf32> -> vector<256x4xf32>
    %c0_3 = arith.constant 0 : index
    %c0_4 = arith.constant 0 : index
    %3 = vector.load %arg3[%c0_3, %c0_4] : memref<1x4xf32, #tpu.memory_space<vmem>>, vector<1x4xf32>
    %4 = vector.broadcast %3 : vector<1x4xf32> to vector<256x4xf32>
    %5 = arith.mulf %2, %4 : vector<256x4xf32>
    %c0_5 = arith.constant 0 : index
    %c0_6 = arith.constant 0 : index
    %6 = vector.load %arg4[%c0_5, %c0_6] : memref<256x4xf32, #tpu.memory_space<vmem>>, vector<256x4xf32>
    tpu.vector_store %arg4[%c0_5, %c0_6], %5 {strides = array<i32>} : memref<256x4xf32, #tpu.memory_space<vmem>>, vector<256x4xf32>,
    return
  }
  func.func @transform_0(%arg0: i32) -> (i32, i32) {
    %c0_i32 = arith.constant 0 : i32
    %c0_i32_0 = arith.constant 0 : i32
    return %arg0, %c0_i32 : i32, i32
  }
  func.func @transform_1(%arg0: i32) -> (i32, i32) {
    %c0_i32 = arith.constant 0 : i32
    %c0_i32_0 = arith.constant 0 : i32
    %c0_i32_1 = arith.constant 0 : i32
    return %c0_i32, %c0_i32_0 : i32, i32
  }
  func.func @transform_2(%arg0: i32) -> (i32, i32) {
    %c0_i32 = arith.constant 0 : i32
    %c0_i32_0 = arith.constant 0 : i32
    %c0_i32_1 = arith.constant 0 : i32
    return %c0_i32, %c0_i32_0 : i32, i32
  }
  func.func @transform_3(%arg0: i32) -> (i32, i32) {
    %c0_i32 = arith.constant 0 : i32
    %c0_i32_0 = arith.constant 0 : i32
    return %arg0, %c0_i32 : i32, i32
  }
}

</mosaic_0001>

<llo_original>
// kernel: tpu_custom_call.1
$region0: #{tpu_custom_call.1}
  #allocation0 [shape = 'u32[]', space=smem, size = 0x4, offset = 0x4, fixed_abs, tag = 'smem constant byte address 0x4 - core index']
  #allocation1 [shape = 'u32[144,128]{1,0:T(1,128)}', space=vmem, size = 0x12000, scoped, tag = 'internal scratch']
  %s0 = inlined_call_operand.vmem [shape: f32[1024,32], index: 0, kind: input, shape index: {}]
  %s1 = inlined_call_operand.vmem [shape: f32[32,4], index: 1, kind: input, shape index: {}]
  %s2 = inlined_call_operand.vmem [shape: f32[1,4], index: 2, kind: input, shape index: {}]
  %s3 = inlined_call_operand.vmem [shape: f32[1024,4], index: 3, kind: output, shape index: {}]
  %s4 = sld [smem:[#allocation0]]
  $region45: #{tpu_custom_call.1} parent=0
    _
  %s6 = ssub.s32 1, %s4
  %s7 = scalar_select 0, %s6, %s4
  loop: start=0, step=1, limit=6
  $region2: #{tpu_custom_call.1} parent=0 // loop_pre_header
    _
  $region3: #{tpu_custom_call.1} parent=0 // loop_header
    %s9 = sphi 0, %s13
    %p10 = scmp.ge.s32.totalorder %s9, 6
    %s19 = sphi 0, %s21
    %s22 = sphi 0, %s19
    %s23 = sphi 0, %s22
    %s39 = sphi 0, %s23
    %s43 = sphi 0, %s43
    %s45 = sphi 0, %s43
    %s46 = sphi 0, %s45
    %s60 = sphi 0, %s46
    %s64 = sphi 0, %s64
    %s66 = sphi 0, %s64
    %s67 = sphi 0, %s66
    %s81 = sphi 0, %s67
    %s87 = sphi 0, %s89
    %s90 = sphi 0, %s87
    %s91 = sphi 0, %s90
    %s107 = sphi 0, %s91
  $region4: #{tpu_custom_call.1} parent=0 // loop_header_branch
    %12 = sbr.rel (%p10) target = $region8
  $region5: #{tpu_custom_call.1} parent=0 // loop_body
    %s14 = ssub.s32 %s9, 1
    %s15 = ssub.s32 %s9, 2
    %s16 = sadd.s32 %s9, 1
    %s17 = ssub.s32 %s9, %s16
    %p18 = scmp.eq.s32.totalorder %s17, 0
    %s20 = sadd.s32 %s19, 1
    %s21 = scalar_select %p18, %s19, %s20
    %p24 = pneg %p18
    %p25 = scmp.eq.s32.totalorder %s9, 3
    %p26 = por %p24, %p25
    %p27 = scmp.ne.s32.totalorder %s19, %s22
    %p28 = scmp.eq.s32.totalorder %s9, 0
    %p29 = por %p27, %p28
    %p30 = scmp.ne.s32.totalorder %s19, %s22
    %p31 = scmp.eq.s32.totalorder %s14, 3
    %p32 = por %p30, %p31
    %p33 = scmp.ne.s32.totalorder %s22, %s23
    %p34 = scmp.eq.s32.totalorder %s14, 0
    %p35 = por %p33, %p34
    %p36 = scmp.ne.s32.totalorder %s22, %s23
    %p37 = scmp.eq.s32.totalorder %s15, 3
    %p38 = por %p36, %p37
    %p40 = scmp.ne.s32.totalorder %s23, %s39
    %p41 = scmp.eq.s32.totalorder %s15, 0
    %p42 = por %p40, %p41
    %s44 = sadd.s32 %s43, 1
    %p47 = scmp.eq.s32.totalorder %s9, 3
    %p48 = scmp.ne.s32.totalorder %s43, %s45
    %p49 = scmp.eq.s32.totalorder %s9, 0
    %p50 = por %p48, %p49
    %p51 = scmp.ne.s32.totalorder %s43, %s45
    %p52 = scmp.eq.s32.totalorder %s14, 3
    %p53 = por %p51, %p52
    %p54 = scmp.ne.s32.totalorder %s45, %s46
    %p55 = scmp.eq.s32.totalorder %s14, 0
    %p56 = por %p54, %p55
    %p57 = scmp.ne.s32.totalorder %s45, %s46
    %p58 = scmp.eq.s32.totalorder %s15, 3
    %p59 = por %p57, %p58
    %p61 = scmp.ne.s32.totalorder %s46, %s60
    %p62 = scmp.eq.s32.totalorder %s15, 0
    %p63 = por %p61, %p62
    %s65 = sadd.s32 %s64, 1
    %p68 = scmp.eq.s32.totalorder %s9, 3
    %p69 = scmp.ne.s32.totalorder %s64, %s66
    %p70 = scmp.eq.s32.totalorder %s9, 0
    %p71 = por %p69, %p70
    %p72 = scmp.ne.s32.totalorder %s64, %s66
    %p73 = scmp.eq.s32.totalorder %s14, 3
    %p74 = por %p72, %p73
    %p75 = scmp.ne.s32.totalorder %s66, %s67
    %p76 = scmp.eq.s32.totalorder %s14, 0
    %p77 = por %p75, %p76
    %p78 = scmp.ne.s32.totalorder %s66, %s67
    %p79 = scmp.eq.s32.totalorder %s15, 3
    %p80 = por %p78, %p79
    %p82 = scmp.ne.s32.totalorder %s67, %s81
    %p83 = scmp.eq.s32.totalorder %s15, 0
    %p84 = por %p82, %p83
    %s85 = ssub.s32 %s9, %s16
    %p86 = scmp.eq.s32.totalorder %s85, 0
    %s88 = sadd.s32 %s87, 1
    %s89 = scalar_select %p86, %s87, %s88
    %p92 = pneg %p86
    %p93 = scmp.eq.s32.totalorder %s9, 3
    %p94 = por %p92, %p93
    %p95 = scmp.ne.s32.totalorder %s87, %s90
    %p96 = scmp.eq.s32.totalorder %s9, 0
    %p97 = por %p95, %p96
    %p98 = scmp.ne.s32.totalorder %s87, %s90
    %p99 = scmp.eq.s32.totalorder %s14, 3
    %p100 = por %p98, %p99
    %p101 = scmp.ne.s32.totalorder %s90, %s91
    %p102 = scmp.eq.s32.totalorder %s14, 0
    %p103 = por %p101, %p102
    %p104 = scmp.ne.s32.totalorder %s90, %s91
    %p105 = scmp.eq.s32.totalorder %s15, 3
    %p106 = por %p104, %p105
    %p108 = scmp.ne.s32.totalorder %s91, %s107
    %p109 = scmp.eq.s32.totalorder %s15, 0
    %p110 = por %p108, %p109
    %p111 = scmp.le.s32.totalorder 1, %s9
    %p112 = scmp.lt.s32.totalorder %s9, 5
    %p113 = pnand %p111, %p112
    %p114 = pneg %p113
    // Predicated region
    $region9: #{tpu_custom_call.1} parent=5 // pred_check
      _
    $region10: #{tpu_custom_call.1} parent=5 // pred_check_branch
      %116 = sbr.rel (%p113) target = $region12
    $region11: #{tpu_custom_call.1} parent=5 // pred_region
      %s117 = ssub.s32 %s9, 1
      // Predicated region
      $region13: #{tpu_custom_call.1} parent=11 // pred_check
        %p118 = pneg %p56
      $region14: #{tpu_custom_call.1} parent=11 // pred_check_branch
        %120 = sbr.rel (%p118) target = $region16
      $region15: #{tpu_custom_call.1} parent=11 // pred_region
        _
      $region16: #{tpu_custom_call.1} parent=11 // pred_fallthru
        _
      // Predicated region
      $region17: #{tpu_custom_call.1} parent=11 // pred_check
        %p121 = pneg %p77
      $region18: #{tpu_custom_call.1} parent=11 // pred_check_branch
        %123 = sbr.rel (%p121) target = $region20
      $region19: #{tpu_custom_call.1} parent=11 // pred_region
        _
      $region20: #{tpu_custom_call.1} parent=11 // pred_fallthru
        _
    $region12: #{tpu_custom_call.1} parent=5 // pred_fallthru
      _
    %p124 = scmp.lt.s32.totalorder %s9, 4
    // Predicated region
    $region21: #{tpu_custom_call.1} parent=5 // pred_check
      %p125 = pneg %p124
    $region22: #{tpu_custom_call.1} parent=5 // pred_check_branch
      %127 = sbr.rel (%p125) target = $region24
    $region23: #{tpu_custom_call.1} parent=5 // pred_region
      // Predicated region
      $region25: #{tpu_custom_call.1} parent=23 // pred_check
        %p128 = pneg %p29
      $region26: #{tpu_custom_call.1} parent=23 // pred_check_branch
        %130 = sbr.rel (%p128) target = $region28
      $region27: #{tpu_custom_call.1} parent=23 // pred_region
        %s131 = smul.u32 32, %s9
        %p132 = scmp.lt.s32.totalorder %s131, 127
        %s133 = scalar_select %p132, %s131, 127
        %s134 = smul.addr %s133, 8
        %s135 = scalar_lea.vmem %s0, %s134
        %s136 = smul.u32 32, %s9
      $region28: #{tpu_custom_call.1} parent=23 // pred_fallthru
        _
    $region24: #{tpu_custom_call.1} parent=5 // pred_fallthru
      _
    %p137 = scmp.le.s32.totalorder 1, %s9
    %p138 = scmp.lt.s32.totalorder %s9, 5
    %p139 = pnand %p137, %p138
    %p140 = pneg %p139
    // Predicated region
    $region29: #{tpu_custom_call.1} parent=5 // pred_check
      _
    $region30: #{tpu_custom_call.1} parent=5 // pred_check_branch
      %142 = sbr.rel (%p139) target = $region32
    $region31: #{tpu_custom_call.1} parent=5 // pred_region
      %s143 = ssub.s32 %s9, 1
      %s144 = smul.u32 32, %s14
      %p145 = scmp.lt.s32.totalorder %s144, 127
      %s146 = scalar_select %p145, %s144, 127
      %s147 = smul.addr %s146, 8
      %s148 = scalar_lea.vmem %s0, %s147
      %p149 = pneg %p35
      %p150 = pneg %p32
      %p151 = pneg %p56
      %p152 = pneg %p53
      %p153 = pneg %p77
      %p154 = pneg %p74
      %p155 = pneg %p103
      %p156 = pneg %p100
      %s157 = smul.u32 32, %s14
      %p158 = scmp.lt.s32.totalorder %s157, 127
      %s159 = scalar_select %p158, %s157, 127
      %s160 = smul.addr %s159, 8
      %s161 = scalar_lea.vmem %s3, %s160
      %s162 = smul.u32 32, %s14
      %p163 = scmp.lt.s32.totalorder %s162, 127
      %s164 = scalar_select %p163, %s162, 127
      %s165 = smul.addr %s164, 8
      %s166 = scalar_lea.vmem %s0, %s165
      %s167 = smul.u32 32, %s14
      %s168 = smul.u32 32, %s14
      %p169 = scmp.lt.s32.totalorder %s168, 127
      %s170 = scalar_select %p169, %s168, 127
      %s171 = smul.addr %s170, 8
      %s172 = scalar_lea.vmem %s3, %s171
      %s173 = smul.u32 32, %s14
      %v174 = vld [vmem:[%s166] sm:$0xff]
      %v175 = vld [vmem:[%s166 + $0x8] sm:$0xff]
      %v176 = vld [vmem:[%s166 + $0x10] sm:$0xff]
      %v177 = vld [vmem:[%s166 + $0x18] sm:$0xff]
      %v178 = vld [vmem:[%s166 + $0x20] sm:$0xff]
      %v179 = vld [vmem:[%s166 + $0x28] sm:$0xff]
      %v180 = vld [vmem:[%s166 + $0x30] sm:$0xff]
      %v181 = vld [vmem:[%s166 + $0x38] sm:$0xff]
      %v182 = vld [vmem:[%s166 + $0x40] sm:$0xff]
      %v183 = vld [vmem:[%s166 + $0x48] sm:$0xff]
      %v184 = vld [vmem:[%s166 + $0x50] sm:$0xff]
      %v185 = vld [vmem:[%s166 + $0x58] sm:$0xff]
      %v186 = vld [vmem:[%s166 + $0x60] sm:$0xff]
      %v187 = vld [vmem:[%s166 + $0x68] sm:$0xff]
      %v188 = vld [vmem:[%s166 + $0x70] sm:$0xff]
      %v189 = vld [vmem:[%s166 + $0x78] sm:$0xff]
      %v190 = vld [vmem:[%s166 + $0x80] sm:$0xff]
      %v191 = vld [vmem:[%s166 + $0x88] sm:$0xff]
      %v192 = vld [vmem:[%s166 + $0x90] sm:$0xff]
      %v193 = vld [vmem:[%s166 + $0x98] sm:$0xff]
      %v194 = vld [vmem:[%s166 + $0xa0] sm:$0xff]
      %v195 = vld [vmem:[%s166 + $0xa8] sm:$0xff]
      %v196 = vld [vmem:[%s166 + $0xb0] sm:$0xff]
      %v197 = vld [vmem:[%s166 + $0xb8] sm:$0xff]
      %v198 = vld [vmem:[%s166 + $0xc0] sm:$0xff]
      %v199 = vld [vmem:[%s166 + $0xc8] sm:$0xff]
      %v200 = vld [vmem:[%s166 + $0xd0] sm:$0xff]
      %v201 = vld [vmem:[%s166 + $0xd8] sm:$0xff]
      %v202 = vld [vmem:[%s166 + $0xe0] sm:$0xff]
      %v203 = vld [vmem:[%s166 + $0xe8] sm:$0xff]
      %v204 = vld [vmem:[%s166 + $0xf0] sm:$0xff]
      %v205 = vld [vmem:[%s166 + $0xf8] sm:$0xff]
      %v206 = vld [vmem:[%s1] sm:$0xff]
      %v207 = vld [vmem:[%s1 + $0x8] sm:$0xff]
      %v208 = vld [vmem:[%s1 + $0x10] sm:$0xff]
      %v209 = vld [vmem:[%s1 + $0x18] sm:$0xff]
      %vm210 = vcmask 261120
      %v212 = vsel %vm210, %v174, 0
      %v215 = vsel %vm210, %v175, 0
      %v218 = vsel %vm210, %v176, 0
      %v221 = vsel %vm210, %v177, 0
      %v224 = vsel %vm210, %v178, 0
      %v227 = vsel %vm210, %v179, 0
      %v230 = vsel %vm210, %v180, 0
      %v233 = vsel %vm210, %v181, 0
      %v236 = vsel %vm210, %v182, 0
      %v239 = vsel %vm210, %v183, 0
      %v242 = vsel %vm210, %v184, 0
      %v245 = vsel %vm210, %v185, 0
      %v248 = vsel %vm210, %v186, 0
      %v251 = vsel %vm210, %v187, 0
      %v254 = vsel %vm210, %v188, 0
      %v257 = vsel %vm210, %v189, 0
      %v260 = vsel %vm210, %v190, 0
      %v263 = vsel %vm210, %v191, 0
      %v266 = vsel %vm210, %v192, 0
      %v269 = vsel %vm210, %v193, 0
      %v272 = vsel %vm210, %v194, 0
      %v275 = vsel %vm210, %v195, 0
      %v278 = vsel %vm210, %v196, 0
      %v281 = vsel %vm210, %v197, 0
      %v284 = vsel %vm210, %v198, 0
      %v287 = vsel %vm210, %v199, 0
      %v290 = vsel %vm210, %v200, 0
      %v293 = vsel %vm210, %v201, 0
      %v296 = vsel %vm210, %v202, 0
      %v299 = vsel %vm210, %v203, 0
      %v302 = vsel %vm210, %v204, 0
      %v305 = vsel %vm210, %v205, 0
      %307 = vmatprep.subr.mxu0 0.0
      %308 = vmatpush1.msra.mxu0 %v206
      %309 = vmatprep.subr.mxu0 0.0
      %310 = vmatpush1.msra.mxu0 %v207
      %311 = vmatprep.subr.mxu0 0.0
      %312 = vmatpush1.msra.mxu0 %v208
      %313 = vmatprep.subr.mxu0 0.0
      %314 = vmatpush1.msra.mxu0 %v209
      %315 = vmatprep.subr.mxu0 0.0
      %316 = vmatpush1.msra.mxu0 0.0
      %317 = vmatprep.subr.mxu0 0.0
      %318 = vmatpush1.msra.mxu0 0.0
      %319 = vmatprep.subr.mxu0 0.0
      %320 = vmatpush1.msra.mxu0 0.0
      %321 = vmatprep.subr.mxu0 0.0
      %322 = vmatpush1.msra.mxu0 0.0
      %323 = vmatprep.subr.mxu0 0.0
      %324 = vmatpush1.msra.mxu0 0.0
      %325 = vmatprep.subr.mxu0 0.0
      %326 = vmatpush1.msra.mxu0 0.0
      %327 = vmatprep.subr.mxu0 0.0
      %328 = vmatpush1.msra.mxu0 0.0
      %329 = vmatprep.subr.mxu0 0.0
      %330 = vmatpush1.msra.mxu0 0.0
      %331 = vmatprep.subr.mxu0 0.0
      %332 = vmatpush1.msra.mxu0 0.0
      %333 = vmatprep.subr.mxu0 0.0
      %334 = vmatpush1.msra.mxu0 0.0
      %335 = vmatprep.subr.mxu0 0.0
      %336 = vmatpush1.msra.mxu0 0.0
      %337 = vmatprep.subr.mxu0 0.0
      %338 = vmatpush1.msra.mxu0 0.0
      %339 = vmatprep.subr.mxu0 0.0
      %340 = vmatpush1.msra.mxu0 0.0
      %341 = vmatprep.subr.mxu0 0.0
      %342 = vmatpush1.msra.mxu0 0.0
      %343 = vmatprep.subr.mxu0 0.0
      %344 = vmatpush1.msra.mxu0 0.0
      %345 = vmatprep.subr.mxu0 0.0
      %346 = vmatpush1.msra.mxu0 0.0
      %347 = vmatprep.subr.mxu0 0.0
      %348 = vmatpush1.msra.mxu0 0.0
      %349 = vmatprep.subr.mxu0 0.0
      %350 = vmatpush1.msra.mxu0 0.0
      %351 = vmatprep.subr.mxu0 0.0
      %352 = vmatpush1.msra.mxu0 0.0
      %353 = vmatprep.subr.mxu0 0.0
      %354 = vmatpush1.msra.mxu0 0.0
      %355 = vmatprep.subr.mxu0 0.0
      %356 = vmatpush1.msra.mxu0 0.0
      %357 = vmatprep.subr.mxu0 0.0
      %358 = vmatpush1.msra.mxu0 0.0
      %359 = vmatprep.subr.mxu0 0.0
      %360 = vmatpush1.msra.mxu0 0.0
      %361 = vmatprep.subr.mxu0 0.0
      %362 = vmatpush1.msra.mxu0 0.0
      %363 = vmatprep.subr.mxu0 0.0
      %364 = vmatpush1.msra.mxu0 0.0
      %365 = vmatprep.subr.mxu0 0.0
      %366 = vmatpush1.msra.mxu0 0.0
      %367 = vmatprep.subr.mxu0 0.0
      %368 = vmatpush1.msra.mxu0 0.0
      %369 = vmatprep.subr.mxu0 0.0
      %370 = vmatpush1.msra.mxu0 0.0
      %371 = vmatprep.mubr.f32.mxu0 0.0
      %372 = vmatmul.mubr.f32.gmra.mrb[0].mxu0 %v212
      %v373 = vpop.f32.mrb[0].mxu0
      %v374 = vadd.f32 0.0, %v373
      %v375 = vpop.f32.mrb[0].mxu0
      %376 = vmatprep.mubr.f32.mxu0 0.0
      %377 = vmatmul.mubr.f32.gmra.mrb[0].mxu0 %v215
      %v378 = vpop.f32.mrb[0].mxu0
      %v379 = vadd.f32 0.0, %v378
      %v380 = vpop.f32.mrb[0].mxu0
      %381 = vmatprep.mubr.f32.mxu0 0.0
      %382 = vmatmul.mubr.f32.gmra.mrb[0].mxu0 %v218
      %v383 = vpop.f32.mrb[0].mxu0
      %v384 = vadd.f32 0.0, %v383
      %v385 = vpop.f32.mrb[0].mxu0
      %386 = vmatprep.mubr.f32.mxu0 0.0
      %387 = vmatmul.mubr.f32.gmra.mrb[0].mxu0 %v221
      %v388 = vpop.f32.mrb[0].mxu0
      %v389 = vadd.f32 0.0, %v388
      %v390 = vpop.f32.mrb[0].mxu0
      %391 = vmatprep.mubr.f32.mxu0 0.0
      %392 = vmatmul.mubr.f32.gmra.mrb[0].mxu0 %v224
      %v393 = vpop.f32.mrb[0].mxu0
      %v394 = vadd.f32 0.0, %v393
      %v395 = vpop.f32.mrb[0].mxu0
      %396 = vmatprep.mubr.f32.mxu0 0.0
      %397 = vmatmul.mubr.f32.gmra.mrb[0].mxu0 %v227
      %v398 = vpop.f32.mrb[0].mxu0
      %v399 = vadd.f32 0.0, %v398
      %v400 = vpop.f32.mrb[0].mxu0
      %401 = vmatprep.mubr.f32.mxu0 0.0
      %402 = vmatmul.mubr.f32.gmra.mrb[0].mxu0 %v230
      %v403 = vpop.f32.mrb[0].mxu0
      %v404 = vadd.f32 0.0, %v403
      %v405 = vpop.f32.mrb[0].mxu0
      %406 = vmatprep.mubr.f32.mxu0 0.0
      %407 = vmatmul.mubr.f32.gmra.mrb[0].mxu0 %v233
      %v408 = vpop.f32.mrb[0].mxu0
      %v409 = vadd.f32 0.0, %v408
      %v410 = vpop.f32.mrb[0].mxu0
      %411 = vmatprep.mubr.f32.mxu0 0.0
      %412 = vmatmul.mubr.f32.gmra.mrb[0].mxu0 %v236
      %v413 = vpop.f32.mrb[0].mxu0
      %v414 = vadd.f32 0.0, %v413
      %v415 = vpop.f32.mrb[0].mxu0
      %416 = vmatprep.mubr.f32.mxu0 0.0
      %417 = vmatmul.mubr.f32.gmra.mrb[0].mxu0 %v239
      %v418 = vpop.f32.mrb[0].mxu0
      %v419 = vadd.f32 0.0, %v418
      %v420 = vpop.f32.mrb[0].mxu0
      %421 = vmatprep.mubr.f32.mxu0 0.0
      %422 = vmatmul.mubr.f32.gmra.mrb[0].mxu0 %v242
      %v423 = vpop.f32.mrb[0].mxu0
      %v424 = vadd.f32 0.0, %v423
      %v425 = vpop.f32.mrb[0].mxu0
      %426 = vmatprep.mubr.f32.mxu0 0.0
      %427 = vmatmul.mubr.f32.gmra.mrb[0].mxu0 %v245
      %v428 = vpop.f32.mrb[0].mxu0
      %v429 = vadd.f32 0.0, %v428
      %v430 = vpop.f32.mrb[0].mxu0
      %431 = vmatprep.mubr.f32.mxu0 0.0
      %432 = vmatmul.mubr.f32.gmra.mrb[0].mxu0 %v248
      %v433 = vpop.f32.mrb[0].mxu0
      %v434 = vadd.f32 0.0, %v433
      %v435 = vpop.f32.mrb[0].mxu0
      %436 = vmatprep.mubr.f32.mxu0 0.0
      %437 = vmatmul.mubr.f32.gmra.mrb[0].mxu0 %v251
      %v438 = vpop.f32.mrb[0].mxu0
      %v439 = vadd.f32 0.0, %v438
      %v440 = vpop.f32.mrb[0].mxu0
      %441 = vmatprep.mubr.f32.mxu0 0.0
      %442 = vmatmul.mubr.f32.gmra.mrb[0].mxu0 %v254
      %v443 = vpop.f32.mrb[0].mxu0
      %v444 = vadd.f32 0.0, %v443
      %v445 = vpop.f32.mrb[0].mxu0
      %446 = vmatprep.mubr.f32.mxu0 0.0
      %447 = vmatmul.mubr.f32.gmra.mrb[0].mxu0 %v257
      %v448 = vpop.f32.mrb[0].mxu0
      %v449 = vadd.f32 0.0, %v448
      %v450 = vpop.f32.mrb[0].mxu0
      %451 = vmatprep.mubr.f32.mxu0 0.0
      %452 = vmatmul.mubr.f32.gmra.mrb[0].mxu0 %v260
      %v453 = vpop.f32.mrb[0].mxu0
      %v454 = vadd.f32 0.0, %v453
      %v455 = vpop.f32.mrb[0].mxu0
      %456 = vmatprep.mubr.f32.mxu0 0.0
      %457 = vmatmul.mubr.f32.gmra.mrb[0].mxu0 %v263
      %v458 = vpop.f32.mrb[0].mxu0
      %v459 = vadd.f32 0.0, %v458
      %v460 = vpop.f32.mrb[0].mxu0
      %461 = vmatprep.mubr.f32.mxu0 0.0
      %462 = vmatmul.mubr.f32.gmra.mrb[0].mxu0 %v266
      %v463 = vpop.f32.mrb[0].mxu0
      %v464 = vadd.f32 0.0, %v463
      %v465 = vpop.f32.mrb[0].mxu0
      %466 = vmatprep.mubr.f32.mxu0 0.0
      %467 = vmatmul.mubr.f32.gmra.mrb[0].mxu0 %v269
      %v468 = vpop.f32.mrb[0].mxu0
      %v469 = vadd.f32 0.0, %v468
      %v470 = vpop.f32.mrb[0].mxu0
      %471 = vmatprep.mubr.f32.mxu0 0.0
      %472 = vmatmul.mubr.f32.gmra.mrb[0].mxu0 %v272
      %v473 = vpop.f32.mrb[0].mxu0
      %v474 = vadd.f32 0.0, %v473
      %v475 = vpop.f32.mrb[0].mxu0
      %476 = vmatprep.mubr.f32.mxu0 0.0
      %477 = vmatmul.mubr.f32.gmra.mrb[0].mxu0 %v275
      %v478 = vpop.f32.mrb[0].mxu0
      %v479 = vadd.f32 0.0, %v478
      %v480 = vpop.f32.mrb[0].mxu0
      %481 = vmatprep.mubr.f32.mxu0 0.0
      %482 = vmatmul.mubr.f32.gmra.mrb[0].mxu0 %v278
      %v483 = vpop.f32.mrb[0].mxu0
      %v484 = vadd.f32 0.0, %v483
      %v485 = vpop.f32.mrb[0].mxu0
      %486 = vmatprep.mubr.f32.mxu0 0.0
      %487 = vmatmul.mubr.f32.gmra.mrb[0].mxu0 %v281
      %v488 = vpop.f32.mrb[0].mxu0
      %v489 = vadd.f32 0.0, %v488
      %v490 = vpop.f32.mrb[0].mxu0
      %491 = vmatprep.mubr.f32.mxu0 0.0
      %492 = vmatmul.mubr.f32.gmra.mrb[0].mxu0 %v284
      %v493 = vpop.f32.mrb[0].mxu0
      %v494 = vadd.f32 0.0, %v493
      %v495 = vpop.f32.mrb[0].mxu0
      %496 = vmatprep.mubr.f32.mxu0 0.0
      %497 = vmatmul.mubr.f32.gmra.mrb[0].mxu0 %v287
      %v498 = vpop.f32.mrb[0].mxu0
      %v499 = vadd.f32 0.0, %v498
      %v500 = vpop.f32.mrb[0].mxu0
      %501 = vmatprep.mubr.f32.mxu0 0.0
      %502 = vmatmul.mubr.f32.gmra.mrb[0].mxu0 %v290
      %v503 = vpop.f32.mrb[0].mxu0
      %v504 = vadd.f32 0.0, %v503
      %v505 = vpop.f32.mrb[0].mxu0
      %506 = vmatprep.mubr.f32.mxu0 0.0
      %507 = vmatmul.mubr.f32.gmra.mrb[0].mxu0 %v293
      %v508 = vpop.f32.mrb[0].mxu0
      %v509 = vadd.f32 0.0, %v508
      %v510 = vpop.f32.mrb[0].mxu0
      %511 = vmatprep.mubr.f32.mxu0 0.0
      %512 = vmatmul.mubr.f32.gmra.mrb[0].mxu0 %v296
      %v513 = vpop.f32.mrb[0].mxu0
      %v514 = vadd.f32 0.0, %v513
      %v515 = vpop.f32.mrb[0].mxu0
      %516 = vmatprep.mubr.f32.mxu0 0.0
      %517 = vmatmul.mubr.f32.gmra.mrb[0].mxu0 %v299
      %v518 = vpop.f32.mrb[0].mxu0
      %v519 = vadd.f32 0.0, %v518
      %v520 = vpop.f32.mrb[0].mxu0
      %521 = vmatprep.mubr.f32.mxu0 0.0
      %522 = vmatmul.mubr.f32.gmra.mrb[0].mxu0 %v302
      %v523 = vpop.f32.mrb[0].mxu0
      %v524 = vadd.f32 0.0, %v523
      %v525 = vpop.f32.mrb[0].mxu0
      %526 = vmatprep.mubr.f32.mxu0 0.0
      %527 = vmatmul.mubr.f32.gmra.mrb[0].mxu0 %v305
      %v528 = vpop.f32.mrb[0].mxu0
      %v529 = vadd.f32 0.0, %v528
      %v530 = vpop.f32.mrb[0].mxu0
      %531 = vdwg.mxu0
      %v532 = vld [vmem:[%s2] sm:$0x1]
      %v534 = vlaneseq
      %v535 = vshrl.u32 %v534, 7
      %v536 = vsub.s32 0, %v535
      %v537 = vrot.slane %v532, %v536
      %v539 = vmul.f32 %v374, %v537
      %v540 = vmul.f32 %v379, %v537
      %v541 = vmul.f32 %v384, %v537
      %v542 = vmul.f32 %v389, %v537
      %v543 = vmul.f32 %v394, %v537
      %v544 = vmul.f32 %v399, %v537
      %v545 = vmul.f32 %v404, %v537
      %v546 = vmul.f32 %v409, %v537
      %v547 = vmul.f32 %v414, %v537
      %v548 = vmul.f32 %v419, %v537
      %v549 = vmul.f32 %v424, %v537
      %v550 = vmul.f32 %v429, %v537
      %v551 = vmul.f32 %v434, %v537
      %v552 = vmul.f32 %v439, %v537
      %v553 = vmul.f32 %v444, %v537
      %v554 = vmul.f32 %v449, %v537
      %v555 = vmul.f32 %v454, %v537
      %v556 = vmul.f32 %v459, %v537
      %v557 = vmul.f32 %v464, %v537
      %v558 = vmul.f32 %v469, %v537
      %v559 = vmul.f32 %v474, %v537
      %v560 = vmul.f32 %v479, %v537
      %v561 = vmul.f32 %v484, %v537
      %v562 = vmul.f32 %v489, %v537
      %v563 = vmul.f32 %v494, %v537
      %v564 = vmul.f32 %v499, %v537
      %v565 = vmul.f32 %v504, %v537
      %v566 = vmul.f32 %v509, %v537
      %v567 = vmul.f32 %v514, %v537
      %v568 = vmul.f32 %v519, %v537
      %v569 = vmul.f32 %v524, %v537
      %v570 = vmul.f32 %v529, %v537
      %vm571 = vcmask 31744
      %572 = vst.msk [vmem:[%s172] sm:$0xff] %vm571, %v539
      %573 = vst.msk [vmem:[%s172 + $0x8] sm:$0xff] %vm571, %v540
      %574 = vst.msk [vmem:[%s172 + $0x10] sm:$0xff] %vm571, %v541
      %575 = vst.msk [vmem:[%s172 + $0x18] sm:$0xff] %vm571, %v542
      %576 = vst.msk [vmem:[%s172 + $0x20] sm:$0xff] %vm571, %v543
      %577 = vst.msk [vmem:[%s172 + $0x28] sm:$0xff] %vm571, %v544
      %578 = vst.msk [vmem:[%s172 + $0x30] sm:$0xff] %vm571, %v545
      %579 = vst.msk [vmem:[%s172 + $0x38] sm:$0xff] %vm571, %v546
      %580 = vst.msk [vmem:[%s172 + $0x40] sm:$0xff] %vm571, %v547
      %581 = vst.msk [vmem:[%s172 + $0x48] sm:$0xff] %vm571, %v548
      %582 = vst.msk [vmem:[%s172 + $0x50] sm:$0xff] %vm571, %v549
      %583 = vst.msk [vmem:[%s172 + $0x58] sm:$0xff] %vm571, %v550
      %584 = vst.msk [vmem:[%s172 + $0x60] sm:$0xff] %vm571, %v551
      %585 = vst.msk [vmem:[%s172 + $0x68] sm:$0xff] %vm571, %v552
      %586 = vst.msk [vmem:[%s172 + $0x70] sm:$0xff] %vm571, %v553
      %587 = vst.msk [vmem:[%s172 + $0x78] sm:$0xff] %vm571, %v554
      %588 = vst.msk [vmem:[%s172 + $0x80] sm:$0xff] %vm571, %v555
      %589 = vst.msk [vmem:[%s172 + $0x88] sm:$0xff] %vm571, %v556
      %590 = vst.msk [vmem:[%s172 + $0x90] sm:$0xff] %vm571, %v557
      %591 = vst.msk [vmem:[%s172 + $0x98] sm:$0xff] %vm571, %v558
      %592 = vst.msk [vmem:[%s172 + $0xa0] sm:$0xff] %vm571, %v559
      %593 = vst.msk [vmem:[%s172 + $0xa8] sm:$0xff] %vm571, %v560
      %594 = vst.msk [vmem:[%s172 + $0xb0] sm:$0xff] %vm571, %v561
      %595 = vst.msk [vmem:[%s172 + $0xb8] sm:$0xff] %vm571, %v562
      %596 = vst.msk [vmem:[%s172 + $0xc0] sm:$0xff] %vm571, %v563
      %597 = vst.msk [vmem:[%s172 + $0xc8] sm:$0xff] %vm571, %v564
      %598 = vst.msk [vmem:[%s172 + $0xd0] sm:$0xff] %vm571, %v565
      %599 = vst.msk [vmem:[%s172 + $0xd8] sm:$0xff] %vm571, %v566
      %600 = vst.msk [vmem:[%s172 + $0xe0] sm:$0xff] %vm571, %v567
      %601 = vst.msk [vmem:[%s172 + $0xe8] sm:$0xff] %vm571, %v568
      %602 = vst.msk [vmem:[%s172 + $0xf0] sm:$0xff] %vm571, %v569
      %603 = vst.msk [vmem:[%s172 + $0xf8] sm:$0xff] %vm571, %v570
      %s604 = smul.u32 32, %s14
      %p605 = scmp.lt.s32.totalorder %s604, 127
      %s606 = scalar_select %p605, %s604, 127
      %s607 = smul.addr %s606, 8
      %s608 = scalar_lea.vmem %s3, %s607
      // Predicated region
      $region33: #{tpu_custom_call.1} parent=31 // pred_check
        %p609 = pneg %p100
      $region34: #{tpu_custom_call.1} parent=31 // pred_check_branch
        %611 = sbr.rel (%p609) target = $region36
      $region35: #{tpu_custom_call.1} parent=31 // pred_region
        %s612 = smul.u32 32, %s14
      $region36: #{tpu_custom_call.1} parent=31 // pred_fallthru
        _
    $region32: #{tpu_custom_call.1} parent=5 // pred_fallthru
      _
    %p613 = scmp.le.s32.totalorder 2, %s9
    // Predicated region
    $region37: #{tpu_custom_call.1} parent=5 // pred_check
      %p614 = pneg %p613
    $region38: #{tpu_custom_call.1} parent=5 // pred_check_branch
      %616 = sbr.rel (%p614) target = $region40
    $region39: #{tpu_custom_call.1} parent=5 // pred_region
      %s617 = ssub.s32 %s9, 2
      // Predicated region
      $region41: #{tpu_custom_call.1} parent=39 // pred_check
        %p618 = pneg %p106
      $region42: #{tpu_custom_call.1} parent=39 // pred_check_branch
        %620 = sbr.rel (%p618) target = $region44
      $region43: #{tpu_custom_call.1} parent=39 // pred_region
        %s621 = smul.u32 32, %s15
        %p622 = scmp.lt.s32.totalorder %s621, 127
        %s623 = scalar_select %p622, %s621, 127
        %s624 = smul.addr %s623, 8
        %s625 = scalar_lea.vmem %s3, %s624
      $region44: #{tpu_custom_call.1} parent=39 // pred_fallthru
        _
    $region40: #{tpu_custom_call.1} parent=5 // pred_fallthru
      _
  $region6: #{tpu_custom_call.1} parent=0 // loop_footer
    %s13 = sadd.s32 1, %s9
  $region7: #{tpu_custom_call.1} parent=0 // loop_footer_branch
    %8 = sbr.rel target = $region3
  $region8: #{tpu_custom_call.1} parent=0 // loop_exit
    _

</llo_original>
